<compile_context>
chip_gen: v5e
topology: v5e:2x2
jax: 0.10.0
libtpu: 0.0.40
codegen_flags: <defaults>
</compile_context>

<pallas_src>
import functools

import jax
import jax.numpy as jnp
from jax.experimental import pallas as pl
from jax.experimental.pallas import tpu as pltpu


# --------------------------------------------------------------------------- #
# Phase 1: node projection h = x @ W and the attention-logit halves.
# --------------------------------------------------------------------------- #
def _project_kernel(x_ref, w_ref, a_src_ref, a_dst_ref, h_ref, fsrc_ref, fdst_ref):
    h = jnp.dot(x_ref[...], w_ref[...], preferred_element_type=jnp.float32)
    h_ref[...] = h
    # Logit halves on the VPU + cross-lane reduce (XLU) instead of (N,1) MXU matmuls.
    fsrc_ref[...] = jnp.sum(h * a_src_ref[...], axis=-1, keepdims=True)
    fdst_ref[...] = jnp.sum(h * a_dst_ref[...], axis=-1, keepdims=True)


# --------------------------------------------------------------------------- #
# Phase 2a: single-pass masked softmax + aggregation (whole row stripe in VMEM).
# --------------------------------------------------------------------------- #
def _attention_fast_kernel(fsrc_ref, fdst_ref, adj_ref, h_ref, out_ref, *, alpha):
    e = fsrc_ref[...] + fdst_ref[...]                        # (TM,1)+(1,N) -> (TM,N)
    e = jnp.maximum(e, jnp.float32(alpha) * e)               # LeakyReLU (0 < alpha < 1)
    e = jnp.where(adj_ref[...] > 0, e, jnp.float32(-9e15))   # mask non-edges
    m = jnp.max(e, axis=1, keepdims=True)
    p = jnp.exp(e - m)
    l = jnp.sum(p, axis=1, keepdims=True)
    h_prime = jnp.dot(p, h_ref[...], preferred_element_type=jnp.float32)
    h_prime = h_prime * pl.reciprocal(l, approx=False)
    out_ref[...] = jnp.where(h_prime > 0, h_prime, jnp.expm1(h_prime))   # ELU


# --------------------------------------------------------------------------- #
# Phase 2b: flash-style online softmax over neighbour column tiles (fallback).
# --------------------------------------------------------------------------- #
def _attention_online_kernel(fsrc_ref, fdst_ref, adj_ref, h_ref, out_ref,
                             m_sc, l_sc, *, alpha, tile_n, h_resident):
    j = pl.program_id(1)

    @pl.when(j == 0)
    def _():
        m_sc[...] = jnp.full_like(m_sc, -jnp.inf)
        l_sc[...] = jnp.zeros_like(l_sc)
        out_ref[...] = jnp.zeros_like(out_ref)

    e = fsrc_ref[...] + fdst_ref[...]
    e = jnp.maximum(e, jnp.float32(alpha) * e)
    e = jnp.where(adj_ref[...] > 0, e, jnp.float32(-9e15))

    m_prev = m_sc[...]
    m_new = jnp.maximum(m_prev, jnp.max(e, axis=1, keepdims=True))
    corr = jnp.exp(m_prev - m_new)
    p = jnp.exp(e - m_new)
    l_sc[...] = corr * l_sc[...] + jnp.sum(p, axis=1, keepdims=True)

    if h_resident:
        # h kept fully VMEM-resident (grid-invariant block); slice the column tile here.
        start = pl.multiple_of(j * tile_n, tile_n)
        h_blk = h_ref[pl.ds(start, tile_n), :]
    else:
        h_blk = h_ref[...]

    # Accumulate the (unnormalized) numerator directly into the j-resident out_ref.
    out_ref[...] = corr * out_ref[...] + jnp.dot(
        p, h_blk, preferred_element_type=jnp.float32)
    m_sc[...] = m_new

    @pl.when(j == pl.num_programs(1) - 1)
    def _():
        h_prime = out_ref[...] * pl.reciprocal(l_sc[...], approx=False)
        out_ref[...] = jnp.where(h_prime > 0, h_prime, jnp.expm1(h_prime))


# --------------------------------------------------------------------------- #
# Budgeting helpers.
# --------------------------------------------------------------------------- #
def _vmem_limit_bytes():
    cap = 64 * 1024 * 1024  # conservative (v7x) fallback if the query is unavailable
    try:
        cap = int(pltpu.get_tpu_info().vmem_capacity_bytes)
    except Exception:
        pass
    # ~96 MiB on v5e/v6e (128 MiB VMEM), ~48 MiB on v7x (64 MiB VMEM).
    return min(int(cap * 3 // 4), 112 * 1024 * 1024)


def _pick_tile(n, cap, prefer_two=False):
    cands = (2048, 1024, 512, 256, 128, 64, 32, 16, 8)
    for t in cands:
        if t <= cap and n % t == 0 and (not prefer_two or n // t >= 2):
            return t
    for t in cands:
        if t <= cap and n % t == 0:
            return t
    return n


def _fast_bytes(tile_m, n, f_out):
    return (2 * tile_m * n                  # int8 adjacency row stripe, double-buffered
            + 2 * n * f_out * 4             # resident h
            + 2 * n * 4 + 2 * tile_m * 4    # f_dst row / f_src column
            + 2 * tile_m * f_out * 4        # output tile
            + 4 * tile_m * n * 4)           # f32 e/p compiler temporaries (headroom)


def _online_bytes(tile_m, tile_n, n, f_out, h_resident):
    h_b = 2 * n * f_out * 4 if h_resident else 2 * tile_n * f_out * 4
    return (2 * tile_m * tile_n
            + h_b
            + 2 * tile_n * 4 + 2 * tile_m * 4
            + 2 * tile_m * f_out * 4
            + 4 * tile_m * tile_n * 4)


# --------------------------------------------------------------------------- #
# Wrapper.
# --------------------------------------------------------------------------- #
def gat_conv(x, w, a, adj, *, alpha=0.2, tile_m=None, tile_n=None, force_online=False):
    """x: (N,F_in) f32, w: (F_in,F_out) f32, a: (2*F_out,1) f32, adj: (N,N) any dtype."""
    n, f_in = x.shape
    f_out = w.shape[1]
    assert a.shape == (2 * f_out, 1)
    assert adj.shape == (n, n)

    vmem_limit = _vmem_limit_bytes()

    if tile_m is None:
        # >= 2 row tiles whenever possible so v7x's two TensorCores both get work.
        tile_m = _pick_tile(n, 512, prefer_two=True)
    tile_m = min(tile_m, n)
    assert n % tile_m == 0, "N must be divisible by tile_m"

    a_src_row = a[:f_out, :].reshape(1, f_out)
    a_dst_row = a[f_out:, :].reshape(1, f_out)
    # adj only participates as (adj > 0): stream it as int8.
    adj_i8 = adj if adj.dtype == jnp.int8 else (adj > 0).astype(jnp.int8)

    # ---- Phase 1: projection + per-node logit halves. ----
    proj_cost = pl.CostEstimate(
        flops=2 * n * f_in * f_out + 4 * n * f_out,
        transcendentals=0,
        bytes_accessed=4 * (n * f_in + f_in * f_out + 2 * f_out + n * f_out + 2 * n),
    )
    h, f_src, f_dst = pl.pallas_call(
        _project_kernel,
        out_shape=(
            jax.ShapeDtypeStruct((n, f_out), jnp.float32),
            jax.ShapeDtypeStruct((n, 1), jnp.float32),
            jax.ShapeDtypeStruct((n, 1), jnp.float32),
        ),
        grid_spec=pltpu.PrefetchScalarGridSpec(
            num_scalar_prefetch=0,
            grid=(n // tile_m,),
            in_specs=[
                pl.BlockSpec((tile_m, f_in), lambda i: (i, 0)),
                pl.BlockSpec((f_in, f_out), lambda i: (0, 0)),   # grid-invariant
                pl.BlockSpec((1, f_out), lambda i: (0, 0)),
                pl.BlockSpec((1, f_out), lambda i: (0, 0)),
            ],
            out_specs=(
                pl.BlockSpec((tile_m, f_out), lambda i: (i, 0)),
                pl.BlockSpec((tile_m, 1), lambda i: (i, 0)),
                pl.BlockSpec((tile_m, 1), lambda i: (i, 0)),
            ),
        ),
        compiler_params=pltpu.CompilerParams(
            dimension_semantics=("parallel",),
            vmem_limit_bytes=vmem_limit,
        ),
        cost_estimate=proj_cost,
    )(x, w, a_src_row, a_dst_row)

    # Neighbour-side logits as a lane-oriented (1, N) row: column tiles arrive lane-dense.
    # (One tiny one-off XLA transpose; kept outside the kernel to avoid an in-kernel
    #  (TM,1)->(1,TM) relayout.)
    f_dst_row = f_dst.reshape(1, n)

    use_fast = (not force_online) and _fast_bytes(tile_m, n, f_out) <= vmem_limit

    if use_fast:
        # ---- Phase 2 fast path: single-pass softmax, resident h, grid over rows only. ----
        cost = pl.CostEstimate(
            flops=2 * n * n * f_out + 10 * n * n,
            transcendentals=n * n,
            bytes_accessed=n * n + 2 * n * f_out * 4 + 3 * n * 4,
        )
        kernel = functools.partial(_attention_fast_kernel, alpha=alpha)
        return pl.pallas_call(
            kernel,
            out_shape=jax.ShapeDtypeStruct((n, f_out), jnp.float32),
            grid_spec=pltpu.PrefetchScalarGridSpec(
                num_scalar_prefetch=0,
                grid=(n // tile_m,),
                in_specs=[
                    pl.BlockSpec((tile_m, 1), lambda i: (i, 0)),   # f_src (query rows)
                    pl.BlockSpec((1, n), lambda i: (0, 0)),        # f_dst row (invariant)
                    pl.BlockSpec((tile_m, n), lambda i: (i, 0)),   # adjacency stripe (int8)
                    pl.BlockSpec((n, f_out), lambda i: (0, 0)),    # resident h (invariant)
                ],
                out_specs=pl.BlockSpec((tile_m, f_out), lambda i: (i, 0)),
            ),
            compiler_params=pltpu.CompilerParams(
                dimension_semantics=("parallel",),
                vmem_limit_bytes=vmem_limit,
            ),
            cost_estimate=cost,
        )(f_src, f_dst_row, adj_i8, h)

    # ---- Phase 2 fallback: flash-style online softmax over column tiles. ----
    if tile_n is None:
        tile_n = _pick_tile(n, 1024, prefer_two=False)
    tile_n = min(tile_n, n)
    assert n % tile_n == 0, "N must be divisible by tile_n"
    assert tile_n % 128 == 0 or tile_n == n, "tile_n must be a multiple of 128 (or N)"

    h_resident = _online_bytes(tile_m, tile_n, n, f_out, True) <= vmem_limit
    h_spec = (pl.BlockSpec((n, f_out), lambda i, j: (0, 0)) if h_resident
              else pl.BlockSpec((tile_n, f_out), lambda i, j: (j, 0)))
    h_bytes = n * f_out * 4 if h_resident else (n // tile_m) * n * f_out * 4
    cost = pl.CostEstimate(
        flops=2 * n * n * f_out + 12 * n * n + 2 * (n // tile_n) * n * f_out,
        transcendentals=n * n + (n // tile_n) * n,
        bytes_accessed=n * n + h_bytes + n * f_out * 4 + (n // tile_m) * n * 4 + n * 4,
    )
    kernel = functools.partial(_attention_online_kernel, alpha=alpha,
                               tile_n=tile_n, h_resident=h_resident)
    return pl.pallas_call(
        kernel,
        out_shape=jax.ShapeDtypeStruct((n, f_out), jnp.float32),
        grid_spec=pltpu.PrefetchScalarGridSpec(
            num_scalar_prefetch=0,
            grid=(n // tile_m, n // tile_n),
            in_specs=[
                pl.BlockSpec((tile_m, 1), lambda i, j: (i, 0)),       # f_src (query rows)
                pl.BlockSpec((1, tile_n), lambda i, j: (0, j)),       # f_dst (neighbour cols)
                pl.BlockSpec((tile_m, tile_n), lambda i, j: (i, j)),  # adjacency tile (int8)
                h_spec,                                               # h (resident or per-tile)
            ],
            out_specs=pl.BlockSpec((tile_m, f_out), lambda i, j: (i, 0)),
            scratch_shapes=[
                pltpu.VMEM((tile_m, 1), jnp.float32),   # running max
                pltpu.VMEM((tile_m, 1), jnp.float32),   # running denominator
            ],
        ),
        compiler_params=pltpu.CompilerParams(
            dimension_semantics=("parallel", "arbitrary"),
            vmem_limit_bytes=vmem_limit,
        ),
        cost_estimate=cost,
    )(f_src, f_dst_row, adj_i8, h)


def xavier_uniform(key, shape, gain):
    # torch.nn.init.xavier_uniform_ for a 2-D tensor: fan_in = shape[1], fan_out = shape[0]
    fan_out, fan_in = shape[0], shape[1]
    bound = gain * jnp.sqrt(6.0 / (fan_in + fan_out))
    return jax.random.uniform(key, shape, jnp.float32, -bound, bound)


if __name__ == "__main__":
    # Small, TPU-friendly sizes; OUT_FEATURES is a multiple of 128 (lane-dense h / out).
    N = 256
    IN_FEATURES = 128
    OUT_FEATURES = 128
    ALPHA = 0.2      # LeakyReLU negative slope
    GAIN = 1.414

    key = jax.random.PRNGKey(0)
    k_x, k_w, k_a, k_adj = jax.random.split(key, 4)

    # Deterministic parameter init mirroring the module's __init__.
    W = xavier_uniform(k_w, (IN_FEATURES, OUT_FEATURES), GAIN)
    a = xavier_uniform(k_a, (2 * OUT_FEATURES, 1), GAIN)

    # Inputs: node features + sparse int8 adjacency with self-loops.
    x = jax.random.normal(k_x, (N, IN_FEATURES), jnp.float32)
    adj = (jax.random.uniform(k_adj, (N, N)) < 0.1).astype(jnp.int8)
    adj = jnp.maximum(adj, jnp.eye(N, dtype=jnp.int8))  # self-loops

    # Pure-JAX f32 reference (same math as the PyTorch forward, eval mode).
    h_full = x @ W
    fsrc_r = h_full @ a[:OUT_FEATURES, :]
    fdst_r = h_full @ a[OUT_FEATURES:, :]
    e_r = fsrc_r + fdst_r.T
    e_r = jnp.where(e_r > 0, e_r, ALPHA * e_r)
    e_r = jnp.where(adj > 0, e_r, -9e15)
    att_r = jax.nn.softmax(e_r, axis=1)
    ref = jax.nn.elu(att_r @ h_full)

    # Fast path (single-pass softmax, VMEM-resident h) -- the default at this size.
    out = gat_conv(x, W, a, adj, alpha=ALPHA)
    jax.block_until_ready(out)
    assert out.shape == (N, OUT_FEATURES)
    err = float(jnp.max(jnp.abs(out - ref)))
    assert jnp.allclose(out, ref, atol=1e-4, rtol=1e-4), err

    # Online (flash-style) fallback path, exercised explicitly so it stays validated.
    out2 = gat_conv(x, W, a, adj, alpha=ALPHA, force_online=True, tile_m=128, tile_n=128)
    jax.block_until_ready(out2)
    err2 = float(jnp.max(jnp.abs(out2 - ref)))
    assert jnp.allclose(out2, ref, atol=1e-4, rtol=1e-4), err2

    print("KERNEL_OK")
</pallas_src>

<mosaic_0001>
module attributes {stable_mosaic.version = 11 : i64} {
  func.func @_project_kernel(%arg0: i32, %arg1: memref<128x128xf32, #tpu.memory_space<vmem>>, %arg2: memref<128x128xf32, #tpu.memory_space<vmem>>, %arg3: memref<1x128xf32, #tpu.memory_space<vmem>>, %arg4: memref<1x128xf32, #tpu.memory_space<vmem>>, %arg5: memref<128x128xf32, #tpu.memory_space<vmem>>, %arg6: memref<128x1xf32, #tpu.memory_space<vmem>>, %arg7: memref<128x1xf32, #tpu.memory_space<vmem>>) attributes {dimension_semantics = [#tpu.dimension_semantics<parallel>], iteration_bounds = array<i64: 2>, scalar_prefetch = 0 : i64, scratch_operands = 0 : i64, tpu.core_type = #tpu.core_type<tc>, window_params = [{transform_indices = @transform_0, window_bounds = array<i64: 128, 128>}, {pipeline_mode = #tpu.pipeline_mode<synchronous>, transform_indices = @transform_1, window_bounds = array<i64: 128, 128>}, {pipeline_mode = #tpu.pipeline_mode<synchronous>, transform_indices = @transform_2, window_bounds = array<i64: 1, 128>}, {pipeline_mode = #tpu.pipeline_mode<synchronous>, transform_indices = @transform_3, window_bounds = array<i64: 1, 128>}, {transform_indices = @transform_4, window_bounds = array<i64: 128, 128>}, {transform_indices = @transform_5, window_bounds = array<i64: 128, 1>}, {transform_indices = @transform_6, window_bounds = array<i64: 128, 1>}]} {
    %c0 = arith.constant 0 : index
    %c0_0 = arith.constant 0 : index
    %0 = vector.load %arg1[%c0, %c0_0] : memref<128x128xf32, #tpu.memory_space<vmem>>, vector<128x128xf32>
    %c0_1 = arith.constant 0 : index
    %c0_2 = arith.constant 0 : index
    %1 = vector.load %arg2[%c0_1, %c0_2] : memref<128x128xf32, #tpu.memory_space<vmem>>, vector<128x128xf32>
    %cst = arith.constant dense<0.000000e+00> : vector<128x128xf32>
    %2 = tpu.matmul %0, %1, %cst {dimension_numbers = #tpu.dot_dimension_numbers<[1], [0], [0], [1], [0, 0, 1, 1], [], []>} : vector<128x128xf32>, vector<128x128xf32>, vector<128x128xf32> -> vector<128x128xf32>
    %c0_3 = arith.constant 0 : index
    %c0_4 = arith.constant 0 : index
    %3 = vector.load %arg5[%c0_3, %c0_4] : memref<128x128xf32, #tpu.memory_space<vmem>>, vector<128x128xf32>
    tpu.vector_store %arg5[%c0_3, %c0_4], %2 {strides = array<i32>} : memref<128x128xf32, #tpu.memory_space<vmem>>, vector<128x128xf32>,
    %c0_5 = arith.constant 0 : index
    %c0_6 = arith.constant 0 : index
    %4 = vector.load %arg3[%c0_5, %c0_6] : memref<1x128xf32, #tpu.memory_space<vmem>>, vector<1x128xf32>
    %5 = vector.broadcast %4 : vector<1x128xf32> to vector<128x128xf32>
    %6 = arith.mulf %2, %5 : vector<128x128xf32>
    %cst_7 = arith.constant dense<0.000000e+00> : vector<128xf32>
    %7 = vector.multi_reduction <add>, %6, %cst_7 [1] : vector<128x128xf32> to vector<128xf32>
    %8 = vector.shape_cast %7 : vector<128xf32> to vector<128x1xf32>
    %c0_8 = arith.constant 0 : index
    %c0_9 = arith.constant 0 : index
    %9 = vector.load %arg6[%c0_8, %c0_9] : memref<128x1xf32, #tpu.memory_space<vmem>>, vector<128x1xf32>
    tpu.vector_store %arg6[%c0_8, %c0_9], %8 {strides = array<i32>} : memref<128x1xf32, #tpu.memory_space<vmem>>, vector<128x1xf32>,
    %c0_10 = arith.constant 0 : index
    %c0_11 = arith.constant 0 : index
    %10 = vector.load %arg4[%c0_10, %c0_11] : memref<1x128xf32, #tpu.memory_space<vmem>>, vector<1x128xf32>
    %11 = vector.broadcast %10 : vector<1x128xf32> to vector<128x128xf32>
    %12 = arith.mulf %2, %11 : vector<128x128xf32>
    %cst_12 = arith.constant dense<0.000000e+00> : vector<128xf32>
    %13 = vector.multi_reduction <add>, %12, %cst_12 [1] : vector<128x128xf32> to vector<128xf32>
    %14 = vector.shape_cast %13 : vector<128xf32> to vector<128x1xf32>
    %c0_13 = arith.constant 0 : index
    %c0_14 = arith.constant 0 : index
    %15 = vector.load %arg7[%c0_13, %c0_14] : memref<128x1xf32, #tpu.memory_space<vmem>>, vector<128x1xf32>
    tpu.vector_store %arg7[%c0_13, %c0_14], %14 {strides = array<i32>} : memref<128x1xf32, #tpu.memory_space<vmem>>, vector<128x1xf32>,
    return
  }
  func.func @transform_0(%arg0: i32) -> (i32, i32) {
    %c0_i32 = arith.constant 0 : i32
    %c0_i32_0 = arith.constant 0 : i32
    return %arg0, %c0_i32 : i32, i32
  }
  func.func @transform_1(%arg0: i32) -> (i32, i32) {
    %c0_i32 = arith.constant 0 : i32
    %c0_i32_0 = arith.constant 0 : i32
    %c0_i32_1 = arith.constant 0 : i32
    return %c0_i32, %c0_i32_0 : i32, i32
  }
  func.func @transform_2(%arg0: i32) -> (i32, i32) {
    %c0_i32 = arith.constant 0 : i32
    %c0_i32_0 = arith.constant 0 : i32
    %c0_i32_1 = arith.constant 0 : i32
    return %c0_i32, %c0_i32_0 : i32, i32
  }
  func.func @transform_3(%arg0: i32) -> (i32, i32) {
    %c0_i32 = arith.constant 0 : i32
    %c0_i32_0 = arith.constant 0 : i32
    %c0_i32_1 = arith.constant 0 : i32
    return %c0_i32, %c0_i32_0 : i32, i32
  }
  func.func @transform_4(%arg0: i32) -> (i32, i32) {
    %c0_i32 = arith.constant 0 : i32
    %c0_i32_0 = arith.constant 0 : i32
    return %arg0, %c0_i32 : i32, i32
  }
  func.func @transform_5(%arg0: i32) -> (i32, i32) {
    %c0_i32 = arith.constant 0 : i32
    %c0_i32_0 = arith.constant 0 : i32
    return %arg0, %c0_i32 : i32, i32
  }
  func.func @transform_6(%arg0: i32) -> (i32, i32) {
    %c0_i32 = arith.constant 0 : i32
    %c0_i32_0 = arith.constant 0 : i32
    return %arg0, %c0_i32 : i32, i32
  }
}

</mosaic_0001>

<llo_original>
// kernel: tpu_custom_call.1
$region0: #{tpu_custom_call.1}
  #allocation0 [shape = 'u32[]', space=smem, size = 0x4, offset = 0x4, fixed_abs, tag = 'smem constant byte address 0x4 - core index']
  #allocation1 [shape = 'u32[72,128]{1,0:T(1,128)}', space=vmem, size = 0x9000, scoped, tag = 'internal scratch']
  %s0 = inlined_call_operand.hbm [shape: f32[256,128], index: 0, kind: input, shape index: {}]
  %s1 = inlined_call_operand.hbm [shape: f32[128,128], index: 1, kind: input, shape index: {}]
  %s2 = inlined_call_operand.vmem [shape: f32[1,128], index: 2, kind: input, shape index: {}]
  %s3 = inlined_call_operand.vmem [shape: f32[1,128], index: 3, kind: input, shape index: {}]
  %s4 = inlined_call_operand.hbm [shape: f32[256,128], index: 4, kind: output, shape index: {0}]
  %s5 = inlined_call_operand.vmem [shape: f32[256,1], index: 5, kind: output, shape index: {1}]
  %s6 = inlined_call_operand.vmem [shape: f32[256,1], index: 6, kind: output, shape index: {2}]
  %7 = xla_tuple %s4, %s5, %s6
  %s8 = sld [smem:[#allocation0]]
  $region73: #{tpu_custom_call.1} parent=0
    _
  %s10 = ssub.s32 1, %s8
  %s11 = scalar_select 0, %s10, %s8
  $region1: #{tpu_custom_call.1} parent=0
    #allocation2 [shape = 'u8[131072]{0}', space=vmem, size = 0x20000, scoped, tag = 'input window, operand 0']
    #allocation3 [shape = 's32[2]{0}', space=sflag, size = 0x8, scoped, tag = 'scoped memory for tpu_custom_call.1']
    #allocation4 [shape = 's32[2]{0}', space=sflag, size = 0x8, scoped, tag = 'scoped memory for tpu_custom_call.1']
    #allocation5 [shape = 'u8[65536]{0}', space=vmem, size = 0x10000, scoped, tag = 'input window, operand 1, single buffered']
    #allocation6 [shape = 's32[1]{0}', space=sflag, size = 0x4, scoped, tag = 'scoped memory for tpu_custom_call.1']
    #allocation7 [shape = 'u8[131072]{0}', space=vmem, size = 0x20000, scoped, tag = 'output window, operand 0']
    %12 = vsyncpa [#allocation3], 0
    %s13 = scalar_lea.sflag [#allocation3], 1
    %14 = vsyncpa %s13, 0
    %15 = vsyncpa [#allocation6], 0
    %16 = vsyncpa [#allocation4], 0
    %s17 = scalar_lea.sflag [#allocation4], 1
    %18 = vsyncpa %s17, 0
    loop: start=0, step=1, limit=4
    $region2: #{tpu_custom_call.1} parent=1 // loop_pre_header
      _
    $region3: #{tpu_custom_call.1} parent=1 // loop_header
      %s20 = sphi 0, %s24
      %p21 = scmp.ge.s32.totalorder %s20, 4
      %s30 = sphi 0, %s32
      %s33 = sphi 0, %s30
      %s34 = sphi 0, %s33
      %s50 = sphi 0, %s34
      %s54 = sphi 0, %s54
      %s56 = sphi 0, %s54
      %s57 = sphi 0, %s56
      %s71 = sphi 0, %s57
      %s75 = sphi 0, %s75
      %s77 = sphi 0, %s75
      %s78 = sphi 0, %s77
      %s92 = sphi 0, %s78
      %s96 = sphi 0, %s96
      %s98 = sphi 0, %s96
      %s99 = sphi 0, %s98
      %s113 = sphi 0, %s99
      %s119 = sphi 0, %s121
      %s122 = sphi 0, %s119
      %s123 = sphi 0, %s122
      %s139 = sphi 0, %s123
      %s145 = sphi 0, %s147
      %s148 = sphi 0, %s145
      %s149 = sphi 0, %s148
      %s165 = sphi 0, %s149
      %s171 = sphi 0, %s173
      %s174 = sphi 0, %s171
      %s175 = sphi 0, %s174
      %s191 = sphi 0, %s175
    $region4: #{tpu_custom_call.1} parent=1 // loop_header_branch
      %23 = sbr.rel (%p21) target = $region8
    $region5: #{tpu_custom_call.1} parent=1 // loop_body
      %s25 = ssub.s32 %s20, 1
      %s26 = ssub.s32 %s20, 2
      %s27 = sadd.s32 %s20, 1
      %s28 = ssub.s32 %s20, %s27
      %p29 = scmp.eq.s32.totalorder %s28, 0
      %s31 = sadd.s32 %s30, 1
      %s32 = scalar_select %p29, %s30, %s31
      %p35 = pneg %p29
      %p36 = scmp.eq.s32.totalorder %s20, 1
      %p37 = por %p35, %p36
      %p38 = scmp.ne.s32.totalorder %s30, %s33
      %p39 = scmp.eq.s32.totalorder %s20, 0
      %p40 = por %p38, %p39
      %p41 = scmp.ne.s32.totalorder %s30, %s33
      %p42 = scmp.eq.s32.totalorder %s25, 1
      %p43 = por %p41, %p42
      %p44 = scmp.ne.s32.totalorder %s33, %s34
      %p45 = scmp.eq.s32.totalorder %s25, 0
      %p46 = por %p44, %p45
      %p47 = scmp.ne.s32.totalorder %s33, %s34
      %p48 = scmp.eq.s32.totalorder %s26, 1
      %p49 = por %p47, %p48
      %p51 = scmp.ne.s32.totalorder %s34, %s50
      %p52 = scmp.eq.s32.totalorder %s26, 0
      %p53 = por %p51, %p52
      %s55 = sadd.s32 %s54, 1
      %p58 = scmp.eq.s32.totalorder %s20, 1
      %p59 = scmp.ne.s32.totalorder %s54, %s56
      %p60 = scmp.eq.s32.totalorder %s20, 0
      %p61 = por %p59, %p60
      %p62 = scmp.ne.s32.totalorder %s54, %s56
      %p63 = scmp.eq.s32.totalorder %s25, 1
      %p64 = por %p62, %p63
      %p65 = scmp.ne.s32.totalorder %s56, %s57
      %p66 = scmp.eq.s32.totalorder %s25, 0
      %p67 = por %p65, %p66
      %p68 = scmp.ne.s32.totalorder %s56, %s57
      %p69 = scmp.eq.s32.totalorder %s26, 1
      %p70 = por %p68, %p69
      %p72 = scmp.ne.s32.totalorder %s57, %s71
      %p73 = scmp.eq.s32.totalorder %s26, 0
      %p74 = por %p72, %p73
      %s76 = sadd.s32 %s75, 1
      %p79 = scmp.eq.s32.totalorder %s20, 1
      %p80 = scmp.ne.s32.totalorder %s75, %s77
      %p81 = scmp.eq.s32.totalorder %s20, 0
      %p82 = por %p80, %p81
      %p83 = scmp.ne.s32.totalorder %s75, %s77
      %p84 = scmp.eq.s32.totalorder %s25, 1
      %p85 = por %p83, %p84
      %p86 = scmp.ne.s32.totalorder %s77, %s78
      %p87 = scmp.eq.s32.totalorder %s25, 0
      %p88 = por %p86, %p87
      %p89 = scmp.ne.s32.totalorder %s77, %s78
      %p90 = scmp.eq.s32.totalorder %s26, 1
      %p91 = por %p89, %p90
      %p93 = scmp.ne.s32.totalorder %s78, %s92
      %p94 = scmp.eq.s32.totalorder %s26, 0
      %p95 = por %p93, %p94
      %s97 = sadd.s32 %s96, 1
      %p100 = scmp.eq.s32.totalorder %s20, 1
      %p101 = scmp.ne.s32.totalorder %s96, %s98
      %p102 = scmp.eq.s32.totalorder %s20, 0
      %p103 = por %p101, %p102
      %p104 = scmp.ne.s32.totalorder %s96, %s98
      %p105 = scmp.eq.s32.totalorder %s25, 1
      %p106 = por %p104, %p105
      %p107 = scmp.ne.s32.totalorder %s98, %s99
      %p108 = scmp.eq.s32.totalorder %s25, 0
      %p109 = por %p107, %p108
      %p110 = scmp.ne.s32.totalorder %s98, %s99
      %p111 = scmp.eq.s32.totalorder %s26, 1
      %p112 = por %p110, %p111
      %p114 = scmp.ne.s32.totalorder %s99, %s113
      %p115 = scmp.eq.s32.totalorder %s26, 0
      %p116 = por %p114, %p115
      %s117 = ssub.s32 %s20, %s27
      %p118 = scmp.eq.s32.totalorder %s117, 0
      %s120 = sadd.s32 %s119, 1
      %s121 = scalar_select %p118, %s119, %s120
      %p124 = pneg %p118
      %p125 = scmp.eq.s32.totalorder %s20, 1
      %p126 = por %p124, %p125
      %p127 = scmp.ne.s32.totalorder %s119, %s122
      %p128 = scmp.eq.s32.totalorder %s20, 0
      %p129 = por %p127, %p128
      %p130 = scmp.ne.s32.totalorder %s119, %s122
      %p131 = scmp.eq.s32.totalorder %s25, 1
      %p132 = por %p130, %p131
      %p133 = scmp.ne.s32.totalorder %s122, %s123
      %p134 = scmp.eq.s32.totalorder %s25, 0
      %p135 = por %p133, %p134
      %p136 = scmp.ne.s32.totalorder %s122, %s123
      %p137 = scmp.eq.s32.totalorder %s26, 1
      %p138 = por %p136, %p137
      %p140 = scmp.ne.s32.totalorder %s123, %s139
      %p141 = scmp.eq.s32.totalorder %s26, 0
      %p142 = por %p140, %p141
      %s143 = ssub.s32 %s20, %s27
      %p144 = scmp.eq.s32.totalorder %s143, 0
      %s146 = sadd.s32 %s145, 1
      %s147 = scalar_select %p144, %s145, %s146
      %p150 = pneg %p144
      %p151 = scmp.eq.s32.totalorder %s20, 1
      %p152 = por %p150, %p151
      %p153 = scmp.ne.s32.totalorder %s145, %s148
      %p154 = scmp.eq.s32.totalorder %s20, 0
      %p155 = por %p153, %p154
      %p156 = scmp.ne.s32.totalorder %s145, %s148
      %p157 = scmp.eq.s32.totalorder %s25, 1
      %p158 = por %p156, %p157
      %p159 = scmp.ne.s32.totalorder %s148, %s149
      %p160 = scmp.eq.s32.totalorder %s25, 0
      %p161 = por %p159, %p160
      %p162 = scmp.ne.s32.totalorder %s148, %s149
      %p163 = scmp.eq.s32.totalorder %s26, 1
      %p164 = por %p162, %p163
      %p166 = scmp.ne.s32.totalorder %s149, %s165
      %p167 = scmp.eq.s32.totalorder %s26, 0
      %p168 = por %p166, %p167
      %s169 = ssub.s32 %s20, %s27
      %p170 = scmp.eq.s32.totalorder %s169, 0
      %s172 = sadd.s32 %s171, 1
      %s173 = scalar_select %p170, %s171, %s172
      %p176 = pneg %p170
      %p177 = scmp.eq.s32.totalorder %s20, 1
      %p178 = por %p176, %p177
      %p179 = scmp.ne.s32.totalorder %s171, %s174
      %p180 = scmp.eq.s32.totalorder %s20, 0
      %p181 = por %p179, %p180
      %p182 = scmp.ne.s32.totalorder %s171, %s174
      %p183 = scmp.eq.s32.totalorder %s25, 1
      %p184 = por %p182, %p183
      %p185 = scmp.ne.s32.totalorder %s174, %s175
      %p186 = scmp.eq.s32.totalorder %s25, 0
      %p187 = por %p185, %p186
      %p188 = scmp.ne.s32.totalorder %s174, %s175
      %p189 = scmp.eq.s32.totalorder %s26, 1
      %p190 = por %p188, %p189
      %p192 = scmp.ne.s32.totalorder %s175, %s191
      %p193 = scmp.eq.s32.totalorder %s26, 0
      %p194 = por %p192, %p193
      %p195 = scmp.le.s32.totalorder 1, %s20
      %p196 = scmp.lt.s32.totalorder %s20, 3
      %p197 = pnand %p195, %p196
      %p198 = pneg %p197
      // Predicated region
      $region9: #{tpu_custom_call.1} parent=5 // pred_check
        _
      $region10: #{tpu_custom_call.1} parent=5 // pred_check_branch
        %200 = sbr.rel (%p197) target = $region12
      $region11: #{tpu_custom_call.1} parent=5 // pred_region
        %s201 = ssub.s32 %s20, 1
        // Predicated region
        $region13: #{tpu_custom_call.1} parent=11 // pred_check
          %p202 = pneg %p67
        $region14: #{tpu_custom_call.1} parent=11 // pred_check_branch
          %204 = sbr.rel (%p202) target = $region16
        $region15: #{tpu_custom_call.1} parent=11 // pred_region
          %206 = vsyncadd [#allocation6], 0
          %s207 = sshll.u32 %s1, 4
          %s208 = int_to_ptr.hbm [resolvable:$true] %s207
          %s209 = sshll.u32 [#allocation5], 4
          %s210 = int_to_ptr.vmem [resolvable:$true] %s209
          %215 = dma.hbm_to_vmem [thread:$0]  %s208, 2048, %s210, [#allocation6], 128, 128, 8
        $region16: #{tpu_custom_call.1} parent=11 // pred_fallthru
          _
        // Predicated region
        $region17: #{tpu_custom_call.1} parent=11 // pred_check
          %p216 = pneg %p88
        $region18: #{tpu_custom_call.1} parent=11 // pred_check_branch
          %218 = sbr.rel (%p216) target = $region20
        $region19: #{tpu_custom_call.1} parent=11 // pred_region
          _
        $region20: #{tpu_custom_call.1} parent=11 // pred_fallthru
          _
        // Predicated region
        $region21: #{tpu_custom_call.1} parent=11 // pred_check
          %p219 = pneg %p109
        $region22: #{tpu_custom_call.1} parent=11 // pred_check_branch
          %221 = sbr.rel (%p219) target = $region24
        $region23: #{tpu_custom_call.1} parent=11 // pred_region
          _
        $region24: #{tpu_custom_call.1} parent=11 // pred_fallthru
          _
      $region12: #{tpu_custom_call.1} parent=5 // pred_fallthru
        _
      %p222 = scmp.lt.s32.totalorder %s20, 2
      // Predicated region
      $region25: #{tpu_custom_call.1} parent=5 // pred_check
        %p223 = pneg %p222
      $region26: #{tpu_custom_call.1} parent=5 // pred_check_branch
        %225 = sbr.rel (%p223) target = $region28
      $region27: #{tpu_custom_call.1} parent=5 // pred_region
        // Predicated region
        $region29: #{tpu_custom_call.1} parent=27 // pred_check
          %p226 = pneg %p40
        $region30: #{tpu_custom_call.1} parent=27 // pred_check_branch
          %228 = sbr.rel (%p226) target = $region32
        $region31: #{tpu_custom_call.1} parent=27 // pred_region
          %s229 = sand.u32 %s30, 1
          %s230 = scalar_lea.sflag [#allocation3], %s229
          %s231 = sand.u32 %s30, 1
          %s232 = smul.addr %s231, 128
          %s233 = scalar_lea.vmem [#allocation2], %s232
          %s234 = smul.u32 16, %s20
          %236 = vsyncadd %s230, 0
          %s237 = smul.addr %s234, 8
          %s238 = scalar_lea.hbm %s0, %s237
          %s239 = sshll.u32 %s238, 4
          %s240 = int_to_ptr.hbm [resolvable:$true] %s239
          %s241 = sshll.u32 %s233, 4
          %s242 = int_to_ptr.vmem [resolvable:$true] %s241
          %247 = dma.hbm_to_vmem [thread:$0]  %s240, 2048, %s242, %s230, 128, 128, 8
        $region32: #{tpu_custom_call.1} parent=27 // pred_fallthru
          _
      $region28: #{tpu_custom_call.1} parent=5 // pred_fallthru
        _
      %p248 = scmp.le.s32.totalorder 1, %s20
      %p249 = scmp.lt.s32.totalorder %s20, 3
      %p250 = pnand %p248, %p249
      %p251 = pneg %p250
      // Predicated region
      $region33: #{tpu_custom_call.1} parent=5 // pred_check
        _
      $region34: #{tpu_custom_call.1} parent=5 // pred_check_branch
        %253 = sbr.rel (%p250) target = $region36
      $region35: #{tpu_custom_call.1} parent=5 // pred_region
        %s254 = ssub.s32 %s20, 1
        %s255 = sand.u32 %s33, 1
        %s256 = scalar_lea.sflag [#allocation3], %s255
        %s257 = sand.u32 %s33, 1
        %s258 = smul.addr %s257, 128
        %s259 = scalar_lea.vmem [#allocation2], %s258
        // Predicated region
        $region37: #{tpu_custom_call.1} parent=35 // pred_check
          %p260 = pneg %p46
        $region38: #{tpu_custom_call.1} parent=35 // pred_check_branch
          %262 = sbr.rel (%p260) target = $region40
        $region39: #{tpu_custom_call.1} parent=35 // pred_region
          %264 = dma.done %s256, 2048
        $region40: #{tpu_custom_call.1} parent=35 // pred_fallthru
          _
        // Predicated region
        $region41: #{tpu_custom_call.1} parent=35 // pred_check
          %p265 = pneg %p67
        $region42: #{tpu_custom_call.1} parent=35 // pred_check_branch
          %267 = sbr.rel (%p265) target = $region44
        $region43: #{tpu_custom_call.1} parent=35 // pred_region
          %269 = dma.done [#allocation6], 2048
        $region44: #{tpu_custom_call.1} parent=35 // pred_fallthru
          _
        %s270 = sand.u32 %s33, 1
        %s271 = scalar_lea.sflag [#allocation3], %s270
        %s272 = sand.u32 %s33, 1
        %s273 = smul.addr %s272, 128
        %s274 = scalar_lea.vmem [#allocation2], %s273
        %p275 = pneg %p46
        %p276 = pneg %p43
        %p277 = pneg %p67
        %p278 = pneg %p64
        %p279 = pneg %p88
        %p280 = pneg %p85
        %p281 = pneg %p109
        %p282 = pneg %p106
        %p283 = pneg %p135
        %p284 = pneg %p132
        %s285 = sand.u32 %s122, 1
        %s286 = scalar_lea.sflag [#allocation4], %s285
        %s287 = sand.u32 %s122, 1
        %s288 = smul.addr %s287, 128
        %s289 = scalar_lea.vmem [#allocation7], %s288
        %p290 = pneg %p161
        %p291 = pneg %p158
        %s292 = smul.u32 16, %s25
        %p293 = scmp.lt.s32.totalorder %s292, 31
        %s294 = scalar_select %p293, %s292, 31
        %s295 = smul.addr %s294, 8
        %s296 = scalar_lea.vmem %s5, %s295
        %p297 = pneg %p187
        %p298 = pneg %p184
        %s299 = smul.u32 16, %s25
        %p300 = scmp.lt.s32.totalorder %s299, 31
        %s301 = scalar_select %p300, %s299, 31
        %s302 = smul.addr %s301, 8
        %s303 = scalar_lea.vmem %s6, %s302
        %s304 = smul.u32 16, %s25
        %s305 = smul.u32 16, %s25
        %s306 = smul.u32 16, %s25
        %p307 = scmp.lt.s32.totalorder %s306, 31
        %s308 = scalar_select %p307, %s306, 31
        %s309 = smul.addr %s308, 8
        %s310 = scalar_lea.vmem %s5, %s309
        %s311 = smul.u32 16, %s25
        %s312 = smul.u32 16, %s25
        %p313 = scmp.lt.s32.totalorder %s312, 31
        %s314 = scalar_select %p313, %s312, 31
        %s315 = smul.addr %s314, 8
        %s316 = scalar_lea.vmem %s6, %s315
        %s317 = smul.u32 16, %s25
        %v318 = vld [vmem:[%s259] sm:$0xff]
        %v319 = vld [vmem:[%s259 + $0x8] sm:$0xff]
        %v320 = vld [vmem:[%s259 + $0x10] sm:$0xff]
        %v321 = vld [vmem:[%s259 + $0x18] sm:$0xff]
        %v322 = vld [vmem:[%s259 + $0x20] sm:$0xff]
        %v323 = vld [vmem:[%s259 + $0x28] sm:$0xff]
        %v324 = vld [vmem:[%s259 + $0x30] sm:$0xff]
        %v325 = vld [vmem:[%s259 + $0x38] sm:$0xff]
        %v326 = vld [vmem:[%s259 + $0x40] sm:$0xff]
        %v327 = vld [vmem:[%s259 + $0x48] sm:$0xff]
        %v328 = vld [vmem:[%s259 + $0x50] sm:$0xff]
        %v329 = vld [vmem:[%s259 + $0x58] sm:$0xff]
        %v330 = vld [vmem:[%s259 + $0x60] sm:$0xff]
        %v331 = vld [vmem:[%s259 + $0x68] sm:$0xff]
        %v332 = vld [vmem:[%s259 + $0x70] sm:$0xff]
        %v333 = vld [vmem:[%s259 + $0x78] sm:$0xff]
        %v334 = vld [vmem:[#allocation5] sm:$0xff]
        %v335 = vld [vmem:[#allocation5 + $0x8] sm:$0xff]
        %v336 = vld [vmem:[#allocation5 + $0x10] sm:$0xff]
        %v337 = vld [vmem:[#allocation5 + $0x18] sm:$0xff]
        %v338 = vld [vmem:[#allocation5 + $0x20] sm:$0xff]
        %v339 = vld [vmem:[#allocation5 + $0x28] sm:$0xff]
        %v340 = vld [vmem:[#allocation5 + $0x30] sm:$0xff]
        %v341 = vld [vmem:[#allocation5 + $0x38] sm:$0xff]
        %v342 = vld [vmem:[#allocation5 + $0x40] sm:$0xff]
        %v343 = vld [vmem:[#allocation5 + $0x48] sm:$0xff]
        %v344 = vld [vmem:[#allocation5 + $0x50] sm:$0xff]
        %v345 = vld [vmem:[#allocation5 + $0x58] sm:$0xff]
        %v346 = vld [vmem:[#allocation5 + $0x60] sm:$0xff]
        %v347 = vld [vmem:[#allocation5 + $0x68] sm:$0xff]
        %v348 = vld [vmem:[#allocation5 + $0x70] sm:$0xff]
        %v349 = vld [vmem:[#allocation5 + $0x78] sm:$0xff]
        %350 = vmatpush.msra.mxu0 %v349
        %351 = vmatpush.msra.mxu0 %v348
        %352 = vmatpush.msra.mxu0 %v347
        %353 = vmatpush.msra.mxu0 %v346
        %354 = vmatpush.msra.mxu0 %v345
        %355 = vmatpush.msra.mxu0 %v344
        %356 = vmatpush.msra.mxu0 %v343
        %357 = vmatpush.msra.mxu0 %v342
        %358 = vmatpush.msra.mxu0 %v341
        %359 = vmatpush.msra.mxu0 %v340
        %360 = vmatpush.msra.mxu0 %v339
        %361 = vmatpush.msra.mxu0 %v338
        %362 = vmatpush.msra.mxu0 %v337
        %363 = vmatpush.msra.mxu0 %v336
        %364 = vmatpush.msra.mxu0 %v335
        %365 = vmatpush.msra.mxu0 %v334
        %366 = vmatmul.f32.gmra.mxu0 %v318
        %v367 = vpop.f32.mrf.mxu0
        %v368 = vadd.f32 0.0, %v367
        %369 = vmatmul.f32.gmra.mxu0 %v319
        %v370 = vpop.f32.mrf.mxu0
        %v371 = vadd.f32 0.0, %v370
        %372 = vmatmul.f32.gmra.mxu0 %v320
        %v373 = vpop.f32.mrf.mxu0
        %v374 = vadd.f32 0.0, %v373
        %375 = vmatmul.f32.gmra.mxu0 %v321
        %v376 = vpop.f32.mrf.mxu0
        %v377 = vadd.f32 0.0, %v376
        %378 = vmatmul.f32.gmra.mxu0 %v322
        %v379 = vpop.f32.mrf.mxu0
        %v380 = vadd.f32 0.0, %v379
        %381 = vmatmul.f32.gmra.mxu0 %v323
        %v382 = vpop.f32.mrf.mxu0
        %v383 = vadd.f32 0.0, %v382
        %384 = vmatmul.f32.gmra.mxu0 %v324
        %v385 = vpop.f32.mrf.mxu0
        %v386 = vadd.f32 0.0, %v385
        %387 = vmatmul.f32.gmra.mxu0 %v325
        %v388 = vpop.f32.mrf.mxu0
        %v389 = vadd.f32 0.0, %v388
        %390 = vmatmul.f32.gmra.mxu0 %v326
        %v391 = vpop.f32.mrf.mxu0
        %v392 = vadd.f32 0.0, %v391
        %393 = vmatmul.f32.gmra.mxu0 %v327
        %v394 = vpop.f32.mrf.mxu0
        %v395 = vadd.f32 0.0, %v394
        %396 = vmatmul.f32.gmra.mxu0 %v328
        %v397 = vpop.f32.mrf.mxu0
        %v398 = vadd.f32 0.0, %v397
        %399 = vmatmul.f32.gmra.mxu0 %v329
        %v400 = vpop.f32.mrf.mxu0
        %v401 = vadd.f32 0.0, %v400
        %402 = vmatmul.f32.gmra.mxu0 %v330
        %v403 = vpop.f32.mrf.mxu0
        %v404 = vadd.f32 0.0, %v403
        %405 = vmatmul.f32.gmra.mxu0 %v331
        %v406 = vpop.f32.mrf.mxu0
        %v407 = vadd.f32 0.0, %v406
        %408 = vmatmul.f32.gmra.mxu0 %v332
        %v409 = vpop.f32.mrf.mxu0
        %v410 = vadd.f32 0.0, %v409
        %411 = vmatmul.f32.gmra.mxu0 %v333
        %v412 = vpop.f32.mrf.mxu0
        %v413 = vadd.f32 0.0, %v412
        %414 = vdwg.mxu0
        %415 = vst [vmem:[%s289] sm:$0xff] %v368
        %416 = vst [vmem:[%s289 + $0x8] sm:$0xff] %v371
        %417 = vst [vmem:[%s289 + $0x10] sm:$0xff] %v374
        %418 = vst [vmem:[%s289 + $0x18] sm:$0xff] %v377
        %419 = vst [vmem:[%s289 + $0x20] sm:$0xff] %v380
        %420 = vst [vmem:[%s289 + $0x28] sm:$0xff] %v383
        %421 = vst [vmem:[%s289 + $0x30] sm:$0xff] %v386
        %422 = vst [vmem:[%s289 + $0x38] sm:$0xff] %v389
        %423 = vst [vmem:[%s289 + $0x40] sm:$0xff] %v392
        %424 = vst [vmem:[%s289 + $0x48] sm:$0xff] %v395
        %425 = vst [vmem:[%s289 + $0x50] sm:$0xff] %v398
        %426 = vst [vmem:[%s289 + $0x58] sm:$0xff] %v401
        %427 = vst [vmem:[%s289 + $0x60] sm:$0xff] %v404
        %428 = vst [vmem:[%s289 + $0x68] sm:$0xff] %v407
        %429 = vst [vmem:[%s289 + $0x70] sm:$0xff] %v410
        %430 = vst [vmem:[%s289 + $0x78] sm:$0xff] %v413
        %v431 = vld [vmem:[%s2] sm:$0x1]
        %v433 = vperm.slane %v431, 0
        %v435 = vmul.f32 %v368, %v433
        %v436 = vmul.f32 %v371, %v433
        %v437 = vmul.f32 %v374, %v433
        %v438 = vmul.f32 %v377, %v433
        %v439 = vmul.f32 %v380, %v433
        %v440 = vmul.f32 %v383, %v433
        %v441 = vmul.f32 %v386, %v433
        %v442 = vmul.f32 %v389, %v433
        %v443 = vmul.f32 %v392, %v433
        %v444 = vmul.f32 %v395, %v433
        %v445 = vmul.f32 %v398, %v433
        %v446 = vmul.f32 %v401, %v433
        %v447 = vmul.f32 %v404, %v433
        %v448 = vmul.f32 %v407, %v433
        %v449 = vmul.f32 %v410, %v433
        %v450 = vmul.f32 %v413, %v433
        %451 = vadd.xlane.f32.xlu0 %v435
        %v452 = vpop.xlane.xlu0 %451
        %453 = vadd.xlane.f32.xlu0 %v436
        %v454 = vpop.xlane.xlu0 %453
        %455 = vadd.xlane.f32.xlu0 %v437
        %v456 = vpop.xlane.xlu0 %455
        %457 = vadd.xlane.f32.xlu0 %v438
        %v458 = vpop.xlane.xlu0 %457
        %459 = vadd.xlane.f32.xlu0 %v439
        %v460 = vpop.xlane.xlu0 %459
        %461 = vadd.xlane.f32.xlu0 %v440
        %v462 = vpop.xlane.xlu0 %461
        %463 = vadd.xlane.f32.xlu0 %v441
        %v464 = vpop.xlane.xlu0 %463
        %465 = vadd.xlane.f32.xlu0 %v442
        %v466 = vpop.xlane.xlu0 %465
        %467 = vadd.xlane.f32.xlu0 %v443
        %v468 = vpop.xlane.xlu0 %467
        %469 = vadd.xlane.f32.xlu0 %v444
        %v470 = vpop.xlane.xlu0 %469
        %471 = vadd.xlane.f32.xlu0 %v445
        %v472 = vpop.xlane.xlu0 %471
        %473 = vadd.xlane.f32.xlu0 %v446
        %v474 = vpop.xlane.xlu0 %473
        %475 = vadd.xlane.f32.xlu0 %v447
        %v476 = vpop.xlane.xlu0 %475
        %477 = vadd.xlane.f32.xlu0 %v448
        %v478 = vpop.xlane.xlu0 %477
        %479 = vadd.xlane.f32.xlu0 %v449
        %v480 = vpop.xlane.xlu0 %479
        %481 = vadd.xlane.f32.xlu0 %v450
        %v482 = vpop.xlane.xlu0 %481
        %vm483 = vcmask 7168
        %484 = vst.msk [vmem:[%s310] sm:$0xff] %vm483, %v452
        %485 = vst.msk [vmem:[%s310 + $0x8] sm:$0xff] %vm483, %v454
        %486 = vst.msk [vmem:[%s310 + $0x10] sm:$0xff] %vm483, %v456
        %487 = vst.msk [vmem:[%s310 + $0x18] sm:$0xff] %vm483, %v458
        %488 = vst.msk [vmem:[%s310 + $0x20] sm:$0xff] %vm483, %v460
        %489 = vst.msk [vmem:[%s310 + $0x28] sm:$0xff] %vm483, %v462
        %490 = vst.msk [vmem:[%s310 + $0x30] sm:$0xff] %vm483, %v464
        %491 = vst.msk [vmem:[%s310 + $0x38] sm:$0xff] %vm483, %v466
        %492 = vst.msk [vmem:[%s310 + $0x40] sm:$0xff] %vm483, %v468
        %493 = vst.msk [vmem:[%s310 + $0x48] sm:$0xff] %vm483, %v470
        %494 = vst.msk [vmem:[%s310 + $0x50] sm:$0xff] %vm483, %v472
        %495 = vst.msk [vmem:[%s310 + $0x58] sm:$0xff] %vm483, %v474
        %496 = vst.msk [vmem:[%s310 + $0x60] sm:$0xff] %vm483, %v476
        %497 = vst.msk [vmem:[%s310 + $0x68] sm:$0xff] %vm483, %v478
        %498 = vst.msk [vmem:[%s310 + $0x70] sm:$0xff] %vm483, %v480
        %499 = vst.msk [vmem:[%s310 + $0x78] sm:$0xff] %vm483, %v482
        %v500 = vld [vmem:[%s3] sm:$0x1]
        %v502 = vperm.slane %v500, 0
        %v504 = vmul.f32 %v368, %v502
        %v505 = vmul.f32 %v371, %v502
        %v506 = vmul.f32 %v374, %v502
        %v507 = vmul.f32 %v377, %v502
        %v508 = vmul.f32 %v380, %v502
        %v509 = vmul.f32 %v383, %v502
        %v510 = vmul.f32 %v386, %v502
        %v511 = vmul.f32 %v389, %v502
        %v512 = vmul.f32 %v392, %v502
        %v513 = vmul.f32 %v395, %v502
        %v514 = vmul.f32 %v398, %v502
        %v515 = vmul.f32 %v401, %v502
        %v516 = vmul.f32 %v404, %v502
        %v517 = vmul.f32 %v407, %v502
        %v518 = vmul.f32 %v410, %v502
        %v519 = vmul.f32 %v413, %v502
        %520 = vadd.xlane.f32.xlu0 %v504
        %v521 = vpop.xlane.xlu0 %520
        %522 = vadd.xlane.f32.xlu0 %v505
        %v523 = vpop.xlane.xlu0 %522
        %524 = vadd.xlane.f32.xlu0 %v506
        %v525 = vpop.xlane.xlu0 %524
        %526 = vadd.xlane.f32.xlu0 %v507
        %v527 = vpop.xlane.xlu0 %526
        %528 = vadd.xlane.f32.xlu0 %v508
        %v529 = vpop.xlane.xlu0 %528
        %530 = vadd.xlane.f32.xlu0 %v509
        %v531 = vpop.xlane.xlu0 %530
        %532 = vadd.xlane.f32.xlu0 %v510
        %v533 = vpop.xlane.xlu0 %532
        %534 = vadd.xlane.f32.xlu0 %v511
        %v535 = vpop.xlane.xlu0 %534
        %536 = vadd.xlane.f32.xlu0 %v512
        %v537 = vpop.xlane.xlu0 %536
        %538 = vadd.xlane.f32.xlu0 %v513
        %v539 = vpop.xlane.xlu0 %538
        %540 = vadd.xlane.f32.xlu0 %v514
        %v541 = vpop.xlane.xlu0 %540
        %542 = vadd.xlane.f32.xlu0 %v515
        %v543 = vpop.xlane.xlu0 %542
        %544 = vadd.xlane.f32.xlu0 %v516
        %v545 = vpop.xlane.xlu0 %544
        %546 = vadd.xlane.f32.xlu0 %v517
        %v547 = vpop.xlane.xlu0 %546
        %548 = vadd.xlane.f32.xlu0 %v518
        %v549 = vpop.xlane.xlu0 %548
        %550 = vadd.xlane.f32.xlu0 %v519
        %v551 = vpop.xlane.xlu0 %550
        %552 = vst.msk [vmem:[%s316] sm:$0xff] %vm483, %v521
        %553 = vst.msk [vmem:[%s316 + $0x8] sm:$0xff] %vm483, %v523
        %554 = vst.msk [vmem:[%s316 + $0x10] sm:$0xff] %vm483, %v525
        %555 = vst.msk [vmem:[%s316 + $0x18] sm:$0xff] %vm483, %v527
        %556 = vst.msk [vmem:[%s316 + $0x20] sm:$0xff] %vm483, %v529
        %557 = vst.msk [vmem:[%s316 + $0x28] sm:$0xff] %vm483, %v531
        %558 = vst.msk [vmem:[%s316 + $0x30] sm:$0xff] %vm483, %v533
        %559 = vst.msk [vmem:[%s316 + $0x38] sm:$0xff] %vm483, %v535
        %560 = vst.msk [vmem:[%s316 + $0x40] sm:$0xff] %vm483, %v537
        %561 = vst.msk [vmem:[%s316 + $0x48] sm:$0xff] %vm483, %v539
        %562 = vst.msk [vmem:[%s316 + $0x50] sm:$0xff] %vm483, %v541
        %563 = vst.msk [vmem:[%s316 + $0x58] sm:$0xff] %vm483, %v543
        %564 = vst.msk [vmem:[%s316 + $0x60] sm:$0xff] %vm483, %v545
        %565 = vst.msk [vmem:[%s316 + $0x68] sm:$0xff] %vm483, %v547
        %566 = vst.msk [vmem:[%s316 + $0x70] sm:$0xff] %vm483, %v549
        %567 = vst.msk [vmem:[%s316 + $0x78] sm:$0xff] %vm483, %v551
        %s568 = sand.u32 %s122, 1
        %s569 = scalar_lea.sflag [#allocation4], %s568
        %s570 = sand.u32 %s122, 1
        %s571 = smul.addr %s570, 128
        %s572 = scalar_lea.vmem [#allocation7], %s571
        %s573 = smul.u32 16, %s25
        %p574 = scmp.lt.s32.totalorder %s573, 31
        %s575 = scalar_select %p574, %s573, 31
        %s576 = smul.addr %s575, 8
        %s577 = scalar_lea.vmem %s5, %s576
        %s578 = smul.u32 16, %s25
        %p579 = scmp.lt.s32.totalorder %s578, 31
        %s580 = scalar_select %p579, %s578, 31
        %s581 = smul.addr %s580, 8
        %s582 = scalar_lea.vmem %s6, %s581
        // Predicated region
        $region45: #{tpu_custom_call.1} parent=35 // pred_check
          %p583 = pneg %p132
        $region46: #{tpu_custom_call.1} parent=35 // pred_check_branch
          %585 = sbr.rel (%p583) target = $region48
        $region47: #{tpu_custom_call.1} parent=35 // pred_region
          %s586 = smul.u32 16, %s25
          %588 = vsyncadd %s569, 0
          %s589 = smul.addr %s586, 8
          %s590 = scalar_lea.hbm %s4, %s589
          %s591 = sshll.u32 %s572, 4
          %s592 = int_to_ptr.vmem [resolvable:$true] %s591
          %s593 = sshll.u32 %s590, 4
          %s594 = int_to_ptr.hbm [resolvable:$true] %s593
          %599 = dma.vmem_to_hbm [thread:$0]  %s592, 2048, %s594, %s569, 128, 128, 8
        $region48: #{tpu_custom_call.1} parent=35 // pred_fallthru
          _
        // Predicated region
        $region49: #{tpu_custom_call.1} parent=35 // pred_check
          %p600 = pneg %p158
        $region50: #{tpu_custom_call.1} parent=35 // pred_check_branch
          %602 = sbr.rel (%p600) target = $region52
        $region51: #{tpu_custom_call.1} parent=35 // pred_region
          %s603 = smul.u32 16, %s25
        $region52: #{tpu_custom_call.1} parent=35 // pred_fallthru
          _
        // Predicated region
        $region53: #{tpu_custom_call.1} parent=35 // pred_check
          %p604 = pneg %p184
        $region54: #{tpu_custom_call.1} parent=35 // pred_check_branch
          %606 = sbr.rel (%p604) target = $region56
        $region55: #{tpu_custom_call.1} parent=35 // pred_region
          %s607 = smul.u32 16, %s25
        $region56: #{tpu_custom_call.1} parent=35 // pred_fallthru
          _
      $region36: #{tpu_custom_call.1} parent=5 // pred_fallthru
        _
      %p608 = scmp.le.s32.totalorder 2, %s20
      // Predicated region
      $region57: #{tpu_custom_call.1} parent=5 // pred_check
        %p609 = pneg %p608
      $region58: #{tpu_custom_call.1} parent=5 // pred_check_branch
        %611 = sbr.rel (%p609) target = $region60
      $region59: #{tpu_custom_call.1} parent=5 // pred_region
        %s612 = ssub.s32 %s20, 2
        // Predicated region
        $region61: #{tpu_custom_call.1} parent=59 // pred_check
          %p613 = pneg %p138
        $region62: #{tpu_custom_call.1} parent=59 // pred_check_branch
          %615 = sbr.rel (%p613) target = $region64
        $region63: #{tpu_custom_call.1} parent=59 // pred_region
          %s616 = sand.u32 %s123, 1
          %s617 = scalar_lea.sflag [#allocation4], %s616
          %s618 = sand.u32 %s123, 1
          %s619 = smul.addr %s618, 128
          %s620 = scalar_lea.vmem [#allocation7], %s619
          %622 = dma.done %s617, 2048
        $region64: #{tpu_custom_call.1} parent=59 // pred_fallthru
          _
        // Predicated region
        $region65: #{tpu_custom_call.1} parent=59 // pred_check
          %p623 = pneg %p164
        $region66: #{tpu_custom_call.1} parent=59 // pred_check_branch
          %625 = sbr.rel (%p623) target = $region68
        $region67: #{tpu_custom_call.1} parent=59 // pred_region
          %s626 = smul.u32 16, %s26
          %p627 = scmp.lt.s32.totalorder %s626, 31
          %s628 = scalar_select %p627, %s626, 31
          %s629 = smul.addr %s628, 8
          %s630 = scalar_lea.vmem %s5, %s629
        $region68: #{tpu_custom_call.1} parent=59 // pred_fallthru
          _
        // Predicated region
        $region69: #{tpu_custom_call.1} parent=59 // pred_check
          %p631 = pneg %p190
        $region70: #{tpu_custom_call.1} parent=59 // pred_check_branch
          %633 = sbr.rel (%p631) target = $region72
        $region71: #{tpu_custom_call.1} parent=59 // pred_region
          %s634 = smul.u32 16, %s26
          %p635 = scmp.lt.s32.totalorder %s634, 31
          %s636 = scalar_select %p635, %s634, 31
          %s637 = smul.addr %s636, 8
          %s638 = scalar_lea.vmem %s6, %s637
        $region72: #{tpu_custom_call.1} parent=59 // pred_fallthru
          _
      $region60: #{tpu_custom_call.1} parent=5 // pred_fallthru
        _
    $region6: #{tpu_custom_call.1} parent=1 // loop_footer
      %s24 = sadd.s32 1, %s20
    $region7: #{tpu_custom_call.1} parent=1 // loop_footer_branch
      %19 = sbr.rel target = $region3
    $region8: #{tpu_custom_call.1} parent=1 // loop_exit
      _
    %639 = vsyncpa [#allocation3], 1
    %s640 = scalar_lea.sflag [#allocation3], 1
    %641 = vsyncpa %s640, 1
    %642 = vsyncpa [#allocation6], 1
    %643 = vsyncpa [#allocation4], 1
    %s644 = scalar_lea.sflag [#allocation4], 1
    %645 = vsyncpa %s644, 1

</llo_original>
